<compile_context>
chip_gen: v5e
topology: v5e:2x2
jax: 0.10.0
libtpu: 0.0.40
codegen_flags: <defaults>
</compile_context>

<pallas_src>
import functools

import jax
import jax.numpy as jnp
import numpy as np
from jax.experimental import pallas as pl
from jax.experimental.pallas import tpu as pltpu

LANES = 128
SUBLANES = 8


def _l1_masked_partials_kernel(x_ref, y_ref, m_ref, num_ref, den_ref, *,
                               tm_rows, valid_rows, mask_tail):
    x = x_ref[...].astype(jnp.float32)
    y = y_ref[...].astype(jnp.float32)
    masked = 1.0 - m_ref[...].astype(jnp.float32)

    # Match PyTorch exactly: multiply each operand by the mask, then |a - b|.
    diff = jnp.abs(x * masked - y * masked)

    if mask_tail:
        # Partial last block: zero both numerator and denominator contributions
        # for rows past the real data (OOB reads may be arbitrary garbage).
        row0 = pl.program_id(0) * tm_rows
        gid = row0 + jax.lax.broadcasted_iota(jnp.int32, (tm_rows, LANES), 0)
        valid = gid < valid_rows
        diff = jnp.where(valid, diff, 0.0)
        masked = jnp.where(valid, masked, 0.0)

    # Fold the row tile onto a single (8, 128) vreg with pure VPU adds; the
    # final cross-lane/sublane reduction is deferred to the wrapper.
    num_ref[...] = (
        diff.reshape(tm_rows // SUBLANES, SUBLANES, LANES).sum(axis=0).reshape(1, SUBLANES, LANES)
    )
    den_ref[...] = (
        masked.reshape(tm_rows // SUBLANES, SUBLANES, LANES).sum(axis=0).reshape(1, SUBLANES, LANES)
    )


def l1_loss_masked_mean(x, y, mask, *, tm=4096):
    """Scalar float32 masked-mean L1 loss; x, y, mask share any shape/dtype."""
    total = int(np.prod(x.shape))

    xf = x.reshape(-1)
    yf = y.reshape(-1)
    mf = mask.reshape(-1)

    # Only pad when the element count is not a multiple of 128 (needed for the
    # lane-dense reshape); pad mask with 1 so masked = 1 - mask = 0 there.
    rem = total % LANES
    if rem:
        pad = LANES - rem
        xf = jnp.pad(xf, (0, pad))
        yf = jnp.pad(yf, (0, pad))
        mf = jnp.pad(mf, (0, pad), constant_values=mf.dtype.type(1))
    rows = -(-total // LANES)

    xf = xf.reshape(rows, LANES)
    yf = yf.reshape(rows, LANES)
    mf = mf.reshape(rows, LANES)

    # Row tile: multiple of 32 sublanes (covers f32 / bf16 / int8 / bool
    # packing) for big inputs; for small inputs just round the row count up to
    # a multiple of 8 and let the in-kernel tail mask handle the overrun.
    tm_cap = max(32, (int(tm) // 32) * 32)
    if rows <= tm_cap:
        tm_rows = max(SUBLANES, -(-rows // SUBLANES) * SUBLANES)
    else:
        tm_rows = tm_cap
    n_chunks = -(-rows // tm_rows)
    mask_tail = (rows % tm_rows) != 0

    kernel = functools.partial(
        _l1_masked_partials_kernel,
        tm_rows=tm_rows, valid_rows=rows, mask_tail=mask_tail)

    row_spec = pl.BlockSpec((tm_rows, LANES), lambda i: (i, 0))
    part_spec = pl.BlockSpec((1, SUBLANES, LANES), lambda i: (i, 0, 0))
    part_shape = jax.ShapeDtypeStruct((n_chunks, SUBLANES, LANES), jnp.float32)

    elem_bytes = xf.dtype.itemsize + yf.dtype.itemsize + mf.dtype.itemsize
    in_bytes = rows * LANES * elem_bytes
    out_bytes = 2 * n_chunks * SUBLANES * LANES * 4
    # Double-buffered inputs + tiny outputs; keep headroom, stay <= 64 MiB
    # (v7x physical VMEM per TC) and >= 32 MiB (so tm=4096 clears v5e's
    # 16 MiB scoped default).
    vmem_need = 2 * tm_rows * LANES * elem_bytes + 2 * 2 * SUBLANES * LANES * 4
    vmem_limit = min(64 * 1024 * 1024, max(32 * 1024 * 1024, vmem_need + (4 << 20)))

    num_p, den_p = pl.pallas_call(
        kernel,
        out_shape=(part_shape, part_shape),
        grid_spec=pltpu.PrefetchScalarGridSpec(
            num_scalar_prefetch=0,
            grid=(n_chunks,),
            in_specs=[row_spec, row_spec, row_spec],
            out_specs=[part_spec, part_spec],
        ),
        compiler_params=pltpu.CompilerParams(
            dimension_semantics=("parallel",),
            vmem_limit_bytes=vmem_limit,
        ),
        cost_estimate=pl.CostEstimate(
            flops=6 * rows * LANES,
            transcendentals=0,
            bytes_accessed=in_bytes + out_bytes,
        ),
    )(xf, yf, mf)

    # Tiny final reduction + division (tree-summed partials -> better numerics).
    return jnp.sum(num_p) / jnp.sum(den_p)


if __name__ == "__main__":
    key = jax.random.PRNGKey(0)
    kx, ky, km = jax.random.split(key, 3)

    # Small NCHW shapes: batch=2, channels=4, spatial=16x16.
    shape = (2, 4, 16, 16)
    x = jax.random.normal(kx, shape, dtype=jnp.float32)
    y = jax.random.normal(ky, shape, dtype=jnp.float32)
    mask = (jax.random.uniform(km, shape) > 0.5).astype(jnp.float32)

    loss = jax.block_until_ready(l1_loss_masked_mean(x, y, mask))

    # Pure-JAX reference.
    masked = 1.0 - mask
    ref = jnp.sum(jnp.abs(x * masked - y * masked)) / jnp.sum(masked)
    np.testing.assert_allclose(np.asarray(loss), np.asarray(ref), rtol=1e-6, atol=1e-6)

    # Ragged shape exercising the small-pad + in-kernel tail-mask path
    # (element count not a multiple of 128).
    shape2 = (3, 5, 7, 11)
    x2 = jax.random.normal(kx, shape2, dtype=jnp.float32)
    y2 = jax.random.normal(ky, shape2, dtype=jnp.float32)
    mask2 = (jax.random.uniform(km, shape2) > 0.5).astype(jnp.float32)
    loss2 = jax.block_until_ready(l1_loss_masked_mean(x2, y2, mask2))
    masked2 = 1.0 - mask2
    ref2 = jnp.sum(jnp.abs(x2 * masked2 - y2 * masked2)) / jnp.sum(masked2)
    np.testing.assert_allclose(np.asarray(loss2), np.asarray(ref2), rtol=1e-6, atol=1e-6)

    # Narrow (bool) mask streamed without wrapper upcast.
    mask3 = jax.random.uniform(km, shape) > 0.5
    loss3 = jax.block_until_ready(l1_loss_masked_mean(x, y, mask3))
    masked3 = 1.0 - mask3.astype(jnp.float32)
    ref3 = jnp.sum(jnp.abs(x * masked3 - y * masked3)) / jnp.sum(masked3)
    np.testing.assert_allclose(np.asarray(loss3), np.asarray(ref3), rtol=1e-6, atol=1e-6)

    print("KERNEL_OK")
</pallas_src>

<mosaic_0001>
module attributes {stable_mosaic.version = 11 : i64} {
  func.func @_l1_masked_partials_kernel(%arg0: i32, %arg1: memref<16x128xf32, #tpu.memory_space<vmem>>, %arg2: memref<16x128xf32, #tpu.memory_space<vmem>>, %arg3: memref<16x128xf32, #tpu.memory_space<vmem>>, %arg4: memref<1x8x128xf32, #tpu.memory_space<vmem>>, %arg5: memref<1x8x128xf32, #tpu.memory_space<vmem>>) attributes {dimension_semantics = [#tpu.dimension_semantics<parallel>], iteration_bounds = array<i64: 1>, scalar_prefetch = 0 : i64, scratch_operands = 0 : i64, tpu.core_type = #tpu.core_type<tc>, window_params = [{transform_indices = @transform_0, window_bounds = array<i64: 16, 128>}, {transform_indices = @transform_1, window_bounds = array<i64: 16, 128>}, {transform_indices = @transform_2, window_bounds = array<i64: 16, 128>}, {transform_indices = @transform_3, window_bounds = array<i64: 1, 8, 128>}, {transform_indices = @transform_4, window_bounds = array<i64: 1, 8, 128>}]} {
    %c0 = arith.constant 0 : index
    %c0_0 = arith.constant 0 : index
    %0 = vector.load %arg1[%c0, %c0_0] : memref<16x128xf32, #tpu.memory_space<vmem>>, vector<16x128xf32>
    %c0_1 = arith.constant 0 : index
    %c0_2 = arith.constant 0 : index
    %1 = vector.load %arg2[%c0_1, %c0_2] : memref<16x128xf32, #tpu.memory_space<vmem>>, vector<16x128xf32>
    %c0_3 = arith.constant 0 : index
    %c0_4 = arith.constant 0 : index
    %2 = vector.load %arg3[%c0_3, %c0_4] : memref<16x128xf32, #tpu.memory_space<vmem>>, vector<16x128xf32>
    %cst = arith.constant 1.000000e+00 : f32
    %3 = vector.broadcast %cst : f32 to vector<16x128xf32>
    %4 = arith.subf %3, %2 : vector<16x128xf32>
    %5 = arith.mulf %0, %4 : vector<16x128xf32>
    %6 = arith.mulf %1, %4 : vector<16x128xf32>
    %7 = arith.subf %5, %6 : vector<16x128xf32>
    %8 = math.absf %7 : vector<16x128xf32>
    %9 = vector.shape_cast %8 : vector<16x128xf32> to vector<2x8x128xf32>
    %cst_5 = arith.constant dense<0.000000e+00> : vector<8x128xf32>
    %10 = vector.multi_reduction <add>, %9, %cst_5 [0] : vector<2x8x128xf32> to vector<8x128xf32>
    %11 = vector.shape_cast %10 : vector<8x128xf32> to vector<1x8x128xf32>
    %c0_6 = arith.constant 0 : index
    %c0_7 = arith.constant 0 : index
    %c0_8 = arith.constant 0 : index
    %12 = vector.load %arg4[%c0_6, %c0_7, %c0_8] : memref<1x8x128xf32, #tpu.memory_space<vmem>>, vector<1x8x128xf32>
    tpu.vector_store %arg4[%c0_6, %c0_7, %c0_8], %11 {strides = array<i32>} : memref<1x8x128xf32, #tpu.memory_space<vmem>>, vector<1x8x128xf32>,
    %13 = vector.shape_cast %4 : vector<16x128xf32> to vector<2x8x128xf32>
    %cst_9 = arith.constant dense<0.000000e+00> : vector<8x128xf32>
    %14 = vector.multi_reduction <add>, %13, %cst_9 [0] : vector<2x8x128xf32> to vector<8x128xf32>
    %15 = vector.shape_cast %14 : vector<8x128xf32> to vector<1x8x128xf32>
    %c0_10 = arith.constant 0 : index
    %c0_11 = arith.constant 0 : index
    %c0_12 = arith.constant 0 : index
    %16 = vector.load %arg5[%c0_10, %c0_11, %c0_12] : memref<1x8x128xf32, #tpu.memory_space<vmem>>, vector<1x8x128xf32>
    tpu.vector_store %arg5[%c0_10, %c0_11, %c0_12], %15 {strides = array<i32>} : memref<1x8x128xf32, #tpu.memory_space<vmem>>, vector<1x8x128xf32>,
    return
  }
  func.func @transform_0(%arg0: i32) -> (i32, i32) {
    %c0_i32 = arith.constant 0 : i32
    %c0_i32_0 = arith.constant 0 : i32
    return %arg0, %c0_i32 : i32, i32
  }
  func.func @transform_1(%arg0: i32) -> (i32, i32) {
    %c0_i32 = arith.constant 0 : i32
    %c0_i32_0 = arith.constant 0 : i32
    return %arg0, %c0_i32 : i32, i32
  }
  func.func @transform_2(%arg0: i32) -> (i32, i32) {
    %c0_i32 = arith.constant 0 : i32
    %c0_i32_0 = arith.constant 0 : i32
    return %arg0, %c0_i32 : i32, i32
  }
  func.func @transform_3(%arg0: i32) -> (i32, i32, i32) {
    %c0_i32 = arith.constant 0 : i32
    %c0_i32_0 = arith.constant 0 : i32
    %c0_i32_1 = arith.constant 0 : i32
    return %arg0, %c0_i32, %c0_i32_0 : i32, i32, i32
  }
  func.func @transform_4(%arg0: i32) -> (i32, i32, i32) {
    %c0_i32 = arith.constant 0 : i32
    %c0_i32_0 = arith.constant 0 : i32
    %c0_i32_1 = arith.constant 0 : i32
    return %arg0, %c0_i32, %c0_i32_0 : i32, i32, i32
  }
}

</mosaic_0001>

<llo_original>
// kernel: tpu_custom_call.1
$region0: #{tpu_custom_call.1}
  #allocation0 [shape = 'u32[]', space=smem, size = 0x4, offset = 0x4, fixed_abs, tag = 'smem constant byte address 0x4 - core index']
  #allocation1 [shape = 'u32[72,128]{1,0:T(1,128)}', space=vmem, size = 0x9000, scoped, tag = 'internal scratch']
  %s0 = inlined_call_operand.hbm [shape: f32[16,128], index: 0, kind: input, shape index: {}]
  %s1 = inlined_call_operand.hbm [shape: f32[16,128], index: 1, kind: input, shape index: {}]
  %s2 = inlined_call_operand.hbm [shape: f32[16,128], index: 2, kind: input, shape index: {}]
  %s3 = inlined_call_operand.hbm [shape: f32[1,8,128], index: 3, kind: output, shape index: {0}]
  %s4 = inlined_call_operand.hbm [shape: f32[1,8,128], index: 4, kind: output, shape index: {1}]
  %5 = xla_tuple %s3, %s4
  %s6 = sld [smem:[#allocation0]]
  $region42: #{tpu_custom_call.1} parent=0
    _
  %s8 = ssub.s32 1, %s6
  %s9 = scalar_select 0, %s8, %s6
  $region1: #{tpu_custom_call.1} parent=0
    #allocation2 [shape = 'u8[8192]{0}', space=vmem, size = 0x2000, scoped, tag = 'input window, operand 0, single buffered']
    #allocation3 [shape = 's32[1]{0}', space=sflag, size = 0x4, scoped, tag = 'scoped memory for tpu_custom_call.1']
    #allocation4 [shape = 's32[1]{0}', space=sflag, size = 0x4, scoped, tag = 'scoped memory for tpu_custom_call.1']
    #allocation5 [shape = 'u8[8192]{0}', space=vmem, size = 0x2000, scoped, tag = 'input window, operand 1, single buffered']
    #allocation6 [shape = 's32[1]{0}', space=sflag, size = 0x4, scoped, tag = 'scoped memory for tpu_custom_call.1']
    #allocation7 [shape = 'u8[8192]{0}', space=vmem, size = 0x2000, scoped, tag = 'input window, operand 2, single buffered']
    #allocation8 [shape = 'u8[4096]{0}', space=vmem, size = 0x1000, scoped, tag = 'output window, operand 0, single buffered']
    #allocation9 [shape = 'u8[4096]{0}', space=vmem, size = 0x1000, scoped, tag = 'output window, operand 1, single buffered']
    #allocation10 [shape = 's32[1]{0}', space=sflag, size = 0x4, scoped, tag = 'scoped memory for tpu_custom_call.1']
    %10 = vsyncpa [#allocation3], 0
    %11 = vsyncpa [#allocation6], 0
    %12 = vsyncpa [#allocation4], 0
    %13 = vsyncpa [#allocation10], 0
    // Predicated region
    $region2: #{tpu_custom_call.1} parent=1 // pred_check
      _
    $region3: #{tpu_custom_call.1} parent=1 // pred_check_branch
      %15 = sbr.rel (0) target = $region5
    $region4: #{tpu_custom_call.1} parent=1 // pred_region
      %17 = vsyncadd [#allocation3], 0
      %s18 = sshll.u32 %s0, 4
      %s19 = int_to_ptr.hbm [resolvable:$true] %s18
      %s20 = sshll.u32 [#allocation2], 4
      %s21 = int_to_ptr.vmem [resolvable:$true] %s20
      %26 = dma.hbm_to_vmem [thread:$0]  %s19, 256, %s21, [#allocation3], 128, 128, 8
    $region5: #{tpu_custom_call.1} parent=1 // pred_fallthru
      _
    // Predicated region
    $region6: #{tpu_custom_call.1} parent=1 // pred_check
      _
    $region7: #{tpu_custom_call.1} parent=1 // pred_check_branch
      %28 = sbr.rel (0) target = $region9
    $region8: #{tpu_custom_call.1} parent=1 // pred_region
      %30 = vsyncadd [#allocation6], 0
      %s31 = sshll.u32 %s1, 4
      %s32 = int_to_ptr.hbm [resolvable:$true] %s31
      %s33 = sshll.u32 [#allocation5], 4
      %s34 = int_to_ptr.vmem [resolvable:$true] %s33
      %39 = dma.hbm_to_vmem [thread:$0]  %s32, 256, %s34, [#allocation6], 128, 128, 8
    $region9: #{tpu_custom_call.1} parent=1 // pred_fallthru
      _
    // Predicated region
    $region10: #{tpu_custom_call.1} parent=1 // pred_check
      _
    $region11: #{tpu_custom_call.1} parent=1 // pred_check_branch
      %41 = sbr.rel (0) target = $region13
    $region12: #{tpu_custom_call.1} parent=1 // pred_region
      %43 = vsyncadd [#allocation6], 0
      %s44 = sshll.u32 %s2, 4
      %s45 = int_to_ptr.hbm [resolvable:$true] %s44
      %s46 = sshll.u32 [#allocation7], 4
      %s47 = int_to_ptr.vmem [resolvable:$true] %s46
      %52 = dma.hbm_to_vmem [thread:$0]  %s45, 256, %s47, [#allocation6], 128, 128, 8
    $region13: #{tpu_custom_call.1} parent=1 // pred_fallthru
      _
    // Predicated region
    $region14: #{tpu_custom_call.1} parent=1 // pred_check
      _
    $region15: #{tpu_custom_call.1} parent=1 // pred_check_branch
      %54 = sbr.rel (0) target = $region17
    $region16: #{tpu_custom_call.1} parent=1 // pred_region
      %56 = dma.done [#allocation3], 256
    $region17: #{tpu_custom_call.1} parent=1 // pred_fallthru
      _
    // Predicated region
    $region18: #{tpu_custom_call.1} parent=1 // pred_check
      _
    $region19: #{tpu_custom_call.1} parent=1 // pred_check_branch
      %58 = sbr.rel (0) target = $region21
    $region20: #{tpu_custom_call.1} parent=1 // pred_region
      %60 = dma.done [#allocation6], 256
    $region21: #{tpu_custom_call.1} parent=1 // pred_fallthru
      _
    // Predicated region
    $region22: #{tpu_custom_call.1} parent=1 // pred_check
      _
    $region23: #{tpu_custom_call.1} parent=1 // pred_check_branch
      %62 = sbr.rel (0) target = $region25
    $region24: #{tpu_custom_call.1} parent=1 // pred_region
      %64 = dma.done [#allocation6], 256
    $region25: #{tpu_custom_call.1} parent=1 // pred_fallthru
      _
    %v65 = vld [vmem:[#allocation2] sm:$0xff]
    %v66 = vld [vmem:[#allocation2 + $0x8] sm:$0xff]
    %v67 = vld [vmem:[#allocation5] sm:$0xff]
    %v68 = vld [vmem:[#allocation5 + $0x8] sm:$0xff]
    %v69 = vld [vmem:[#allocation7] sm:$0xff]
    %v70 = vld [vmem:[#allocation7 + $0x8] sm:$0xff]
    %v71 = vsub.f32 1.0, %v69
    %v72 = vsub.f32 1.0, %v70
    %v73 = vmul.f32 %v65, %v71
    %v74 = vmul.f32 %v66, %v72
    %v75 = vmul.f32 %v67, %v71
    %v76 = vmul.f32 %v68, %v72
    %v77 = vsub.f32 %v73, %v75
    %v78 = vsub.f32 %v74, %v76
    %v79 = vand.u32 2147483647, %v77
    %v80 = vand.u32 2147483647, %v78
    %v81 = vadd.f32 %v79, %v80
    %82 = vst [vmem:[#allocation8] sm:$0xff] %v81
    %v83 = vadd.f32 %v71, %v72
    %84 = vst [vmem:[#allocation9] sm:$0xff] %v83
    // Predicated region
    $region26: #{tpu_custom_call.1} parent=1 // pred_check
      _
    $region27: #{tpu_custom_call.1} parent=1 // pred_check_branch
      %86 = sbr.rel (0) target = $region29
    $region28: #{tpu_custom_call.1} parent=1 // pred_region
      %88 = vsyncadd [#allocation4], 0
      %s90 = sshll.u32 [#allocation8], 4
      %s91 = int_to_ptr.vmem [resolvable:$true] %s90
      %s92 = sshll.u32 %s3, 4
      %s93 = int_to_ptr.hbm [resolvable:$true] %s92
      %95 = dma.vmem_to_hbm [thread:$0]  %s91, 128, %s93, [#allocation4]
    $region29: #{tpu_custom_call.1} parent=1 // pred_fallthru
      _
    // Predicated region
    $region30: #{tpu_custom_call.1} parent=1 // pred_check
      _
    $region31: #{tpu_custom_call.1} parent=1 // pred_check_branch
      %97 = sbr.rel (0) target = $region33
    $region32: #{tpu_custom_call.1} parent=1 // pred_region
      %99 = vsyncadd [#allocation10], 0
      %s101 = sshll.u32 [#allocation9], 4
      %s102 = int_to_ptr.vmem [resolvable:$true] %s101
      %s103 = sshll.u32 %s4, 4
      %s104 = int_to_ptr.hbm [resolvable:$true] %s103
      %106 = dma.vmem_to_hbm [thread:$0]  %s102, 128, %s104, [#allocation10]
    $region33: #{tpu_custom_call.1} parent=1 // pred_fallthru
      _
    // Predicated region
    $region34: #{tpu_custom_call.1} parent=1 // pred_check
      _
    $region35: #{tpu_custom_call.1} parent=1 // pred_check_branch
      %108 = sbr.rel (0) target = $region37
    $region36: #{tpu_custom_call.1} parent=1 // pred_region
      %110 = dma.done [#allocation4], 128
    $region37: #{tpu_custom_call.1} parent=1 // pred_fallthru
      _
    // Predicated region
    $region38: #{tpu_custom_call.1} parent=1 // pred_check
      _
    $region39: #{tpu_custom_call.1} parent=1 // pred_check_branch
      %112 = sbr.rel (0) target = $region41
    $region40: #{tpu_custom_call.1} parent=1 // pred_region
      %114 = dma.done [#allocation10], 128
    $region41: #{tpu_custom_call.1} parent=1 // pred_fallthru
      _
    %115 = vsyncpa [#allocation3], 1
    %116 = vsyncpa [#allocation6], 1
    %117 = vsyncpa [#allocation4], 1
    %118 = vsyncpa [#allocation10], 1

</llo_original>
